<compile_context>
chip_gen: v7x
topology: tpu7x:2x2x1
jax: 0.10.0
libtpu: 0.0.40
codegen_flags: <defaults>
</compile_context>

<pallas_src>
import functools

import jax
import jax.numpy as jnp
from jax.experimental import pallas as pl
from jax.experimental.pallas import tpu as pltpu


def _round_up(x, m):
    return (x + m - 1) // m * m


def _pick_tile(B, tile_b):
    tp = min(max(int(tile_b), 8), _round_up(B, 8))
    return _round_up(tp, 8)


def _pad_rows(x, rows):
    b = x.shape[0]
    if b == rows:
        return x
    pad = [(0, rows - b)] + [(0, 0)] * (x.ndim - 1)
    return jnp.pad(x, pad)


def _vmem_limit_bytes(B_pad, TP, D, ntype, K, out_cols):
    # Upper-bound accounting with (8, 128) tile padding; 4 bytes/elem everywhere.
    def tile_bytes(rows, cols):
        return _round_up(rows, 8) * _round_up(cols, 128) * 4
    need = (tile_bytes(B_pad, D)                    # resident table, single buffer
            + 2 * tile_bytes(TP, ntype * K)         # att block, double buffered
            + 2 * tile_bytes(TP, out_cols)          # output block, double buffered
            + K * tile_bytes(TP, D))                # gather scratch
    return int(min(100 * 1024 * 1024, max(16 * 1024 * 1024, 2 * need + (4 << 20))))


def _fssn_kernel(neigh_ref, attw_ref, feat_ref, out_ref, gath_ref, *,
                 alpha, concat, TP, ntype, K, D):
    t = pl.program_id(0)
    base = pl.multiple_of(t * TP, TP)

    # ---- Gather: copy the K neighbour rows of every sample in this tile into
    #      the (K, TP, D) VMEM scratch.  Indices come from SMEM (scalar prefetch).
    @pl.loop(0, TP)
    def _(p):
        for k in range(K):                                   # K is small -> unrolled
            idx = neigh_ref[(base + p) * K + k]              # scalar int32 from SMEM
            gath_ref[k, pl.ds(p, 1), :] = feat_ref[pl.ds(idx, 1), :]

    # ---- Tile-wide vectorized math (f32 accumulation).
    self_blk = feat_ref[pl.ds(base, TP), :].astype(jnp.float32)     # [TP, D]
    aw = attw_ref[...].astype(jnp.float32)                          # [TP, ntype*K]
    gath = [gath_ref[k].astype(jnp.float32) for k in range(K)]      # K x [TP, D]

    if concat:
        # combined[:, n*D:(n+1)*D] = self + sum_k aw[:, n*K+k] * gathered_k
        pieces = []
        for n in range(ntype):
            acc = self_blk
            for k in range(K):
                acc = acc + aw[:, n * K + k:n * K + k + 1] * gath[k]    # [TP, D] FMA
            pieces.append(acc)
        combined = jnp.concatenate(pieces, axis=1)                      # [TP, ntype*D]
        combined = jnp.where(combined >= 0, combined, alpha * combined)  # LeakyReLU
        out_ref[...] = combined.astype(out_ref.dtype)
    else:
        # mean_n(self + att[n]) = self + sum_k mean_n(aw[:, n, k]) * gathered_k
        acc = self_blk
        inv_ntype = 1.0 / ntype
        for k in range(K):
            s = aw[:, k:k + 1]                                  # n = 0 column
            for n in range(1, ntype):
                s = s + aw[:, n * K + k:n * K + k + 1]
            acc = acc + (s * inv_ntype) * gath[k]               # [TP, D]
        out_ref[...] = acc.astype(out_ref.dtype)


def fssn_forward(neighbors, batch_features, att_weights, *,
                 alpha=0.2, concat=True, tile_b=128):
    """Pallas implementation of Fssn_layers_wosubgraph.forward.

    neighbors:      [B, K] int32 indices into batch_features rows.
    batch_features: [B, D]
    att_weights:    [B, ntype, K]
    """
    B, D = batch_features.shape
    _, ntype, K = att_weights.shape
    dtype = batch_features.dtype

    TP = _pick_tile(B, tile_b)
    B_pad = _round_up(B, TP)
    grid = (B_pad // TP,)

    # Clamp indices (no runtime bounds check on TPU vector loads), then pad the
    # sample axis so every tile is full.
    neighbors = jnp.clip(neighbors.astype(jnp.int32), 0, B - 1)
    neigh_flat = _pad_rows(neighbors, B_pad).reshape(-1)             # [B_pad*K] -> SMEM
    feat = _pad_rows(batch_features, B_pad)                          # [B_pad, D]
    att2d = _pad_rows(att_weights.reshape(B, ntype * K), B_pad)      # [B_pad, ntype*K]

    out_cols = ntype * D if concat else D
    out_shape = jax.ShapeDtypeStruct((B_pad, out_cols), dtype)

    kernel = functools.partial(
        _fssn_kernel, alpha=float(alpha), concat=concat,
        TP=TP, ntype=ntype, K=K, D=D)

    grid_spec = pltpu.PrefetchScalarGridSpec(
        num_scalar_prefetch=1,
        grid=grid,
        in_specs=[
            # flattened att_weights tile (double-buffered, small)
            pl.BlockSpec((TP, ntype * K), lambda t, neigh: (t, 0)),
            # resident feature table: constant block index -> single buffer
            pl.BlockSpec((B_pad, D), lambda t, neigh: (0, 0),
                         pipeline_mode=pl.Buffered(1)),
        ],
        out_specs=pl.BlockSpec((TP, out_cols), lambda t, neigh: (t, 0)),
        scratch_shapes=[pltpu.VMEM((K, TP, D), dtype)],              # gathered rows
    )

    out = pl.pallas_call(
        kernel,
        out_shape=out_shape,
        grid_spec=grid_spec,
        compiler_params=pltpu.CompilerParams(
            dimension_semantics=("parallel",),
            vmem_limit_bytes=_vmem_limit_bytes(B_pad, TP, D, ntype, K, out_cols)),
    )(neigh_flat, att2d, feat)

    return out[:B]


def ref_forward(neighbors, batch_features, att_weights, *, alpha=0.2, concat=True):
    """Pure-JAX reference mirroring the PyTorch forward exactly."""
    gathered = batch_features[neighbors]                             # [B, K, D]
    att_feat = jnp.einsum("bnk,bkd->bnd", att_weights, gathered)     # [B, ntype, D]
    out = batch_features[:, None, :] + att_feat
    if concat:
        out = jnp.where(out >= 0, out, alpha * out)                  # LeakyReLU(alpha)
        return out.reshape(out.shape[0], -1)
    return out.mean(axis=1)


if __name__ == "__main__":
    key = jax.random.PRNGKey(0)
    B, D, ntype, K = 32, 32, 4, 6
    alpha = 0.2

    k1, k2, k3 = jax.random.split(key, 3)
    batch_features = jax.random.normal(k1, (B, D), dtype=jnp.float32)
    att_weights = jax.random.normal(k2, (B, ntype, K), dtype=jnp.float32)
    neighbors = jax.random.randint(k3, (B, K), 0, B, dtype=jnp.int32)

    # concat=True (module default): 2-step grid (B_pad // TP = 2).
    out = fssn_forward(neighbors, batch_features, att_weights,
                       alpha=alpha, concat=True, tile_b=16)
    out = jax.block_until_ready(out)
    ref = ref_forward(neighbors, batch_features, att_weights, alpha=alpha, concat=True)
    assert out.shape == (B, ntype * D), out.shape
    assert jnp.allclose(out, ref, atol=1e-4, rtol=1e-4)

    # concat=False path (mean over ntype).
    out_m = fssn_forward(neighbors, batch_features, att_weights,
                         alpha=alpha, concat=False, tile_b=16)
    out_m = jax.block_until_ready(out_m)
    ref_m = ref_forward(neighbors, batch_features, att_weights, alpha=alpha, concat=False)
    assert out_m.shape == (B, D), out_m.shape
    assert jnp.allclose(out_m, ref_m, atol=1e-4, rtol=1e-4)

    print("KERNEL_OK")
</pallas_src>

<mosaic_0001>
module attributes {stable_mosaic.version = 11 : i64} {
  func.func @_fssn_kernel(%arg0: i32, %arg1: memref<192xi32, #tpu.memory_space<smem>>, %arg2: memref<16x24xf32, #tpu.memory_space<vmem>>, %arg3: memref<32x32xf32, #tpu.memory_space<vmem>>, %arg4: memref<16x128xf32, #tpu.memory_space<vmem>>, %arg5: memref<6x16x32xf32, #tpu.memory_space<vmem>>) attributes {dimension_semantics = [#tpu.dimension_semantics<parallel>], iteration_bounds = array<i64: 2>, scalar_prefetch = 1 : i64, scratch_operands = 1 : i64, tpu.core_type = #tpu.core_type<tc>, window_params = [{transform_indices = @transform_0, window_bounds = array<i64: 16, 24>}, {pipeline_mode = #tpu.pipeline_mode<synchronous>, transform_indices = @transform_1, window_bounds = array<i64: 32, 32>}, {transform_indices = @transform_2, window_bounds = array<i64: 16, 128>}]} {
    %c16_i32 = arith.constant 16 : i32
    %0 = arith.muli %arg0, %c16_i32 : i32
    %1 = tpu.assume_multiple %0, 16 : i32
    %c0_i32 = arith.constant 0 : i32
    %c16_i32_0 = arith.constant 16 : i32
    %2 = arith.addi %c0_i32, %c16_i32_0 : i32
    %c1_i32 = arith.constant 1 : i32
    scf.for %arg6 = %c0_i32 to %2 step %c1_i32  : i32 {
      %c1_i32_20 = arith.constant 1 : i32
      %121 = arith.muli %arg6, %c1_i32_20 : i32
      %c0_i32_21 = arith.constant 0 : i32
      %122 = arith.addi %c0_i32_21, %121 : i32
      %123 = arith.addi %1, %122 : i32
      %c6_i32 = arith.constant 6 : i32
      %124 = arith.muli %123, %c6_i32 : i32
      %c0_i32_22 = arith.constant 0 : i32
      %125 = arith.addi %124, %c0_i32_22 : i32
      %126 = arith.index_cast %125 : i32 to index
      %127 = memref.load %arg1[%126] : memref<192xi32, #tpu.memory_space<smem>>
      %128 = arith.index_cast %127 : i32 to index
      %c0_23 = arith.constant 0 : index
      %129 = vector.load %arg3[%128, %c0_23] : memref<32x32xf32, #tpu.memory_space<vmem>>, vector<1x32xf32>
      %c0_24 = arith.constant 0 : index
      %130 = arith.index_cast %122 : i32 to index
      %c0_25 = arith.constant 0 : index
      %131 = vector.load %arg5[%c0_24, %130, %c0_25] : memref<6x16x32xf32, #tpu.memory_space<vmem>>, vector<1x1x32xf32>
      %132 = vector.shape_cast %131 : vector<1x1x32xf32> to vector<1x32xf32>
      %133 = vector.shape_cast %129 : vector<1x32xf32> to vector<1x1x32xf32>
      tpu.vector_store %arg5[%c0_24, %130, %c0_25], %133 {strides = array<i32>} : memref<6x16x32xf32, #tpu.memory_space<vmem>>, vector<1x1x32xf32>,
      %134 = arith.addi %1, %122 : i32
      %c6_i32_26 = arith.constant 6 : i32
      %135 = arith.muli %134, %c6_i32_26 : i32
      %c1_i32_27 = arith.constant 1 : i32
      %136 = arith.addi %135, %c1_i32_27 : i32
      %137 = arith.index_cast %136 : i32 to index
      %138 = memref.load %arg1[%137] : memref<192xi32, #tpu.memory_space<smem>>
      %139 = arith.index_cast %138 : i32 to index
      %c0_28 = arith.constant 0 : index
      %140 = vector.load %arg3[%139, %c0_28] : memref<32x32xf32, #tpu.memory_space<vmem>>, vector<1x32xf32>
      %c1_29 = arith.constant 1 : index
      %141 = arith.index_cast %122 : i32 to index
      %c0_30 = arith.constant 0 : index
      %142 = vector.load %arg5[%c1_29, %141, %c0_30] : memref<6x16x32xf32, #tpu.memory_space<vmem>>, vector<1x1x32xf32>
      %143 = vector.shape_cast %142 : vector<1x1x32xf32> to vector<1x32xf32>
      %144 = vector.shape_cast %140 : vector<1x32xf32> to vector<1x1x32xf32>
      tpu.vector_store %arg5[%c1_29, %141, %c0_30], %144 {strides = array<i32>} : memref<6x16x32xf32, #tpu.memory_space<vmem>>, vector<1x1x32xf32>,
      %145 = arith.addi %1, %122 : i32
      %c6_i32_31 = arith.constant 6 : i32
      %146 = arith.muli %145, %c6_i32_31 : i32
      %c2_i32 = arith.constant 2 : i32
      %147 = arith.addi %146, %c2_i32 : i32
      %148 = arith.index_cast %147 : i32 to index
      %149 = memref.load %arg1[%148] : memref<192xi32, #tpu.memory_space<smem>>
      %150 = arith.index_cast %149 : i32 to index
      %c0_32 = arith.constant 0 : index
      %151 = vector.load %arg3[%150, %c0_32] : memref<32x32xf32, #tpu.memory_space<vmem>>, vector<1x32xf32>
      %c2_33 = arith.constant 2 : index
      %152 = arith.index_cast %122 : i32 to index
      %c0_34 = arith.constant 0 : index
      %153 = vector.load %arg5[%c2_33, %152, %c0_34] : memref<6x16x32xf32, #tpu.memory_space<vmem>>, vector<1x1x32xf32>
      %154 = vector.shape_cast %153 : vector<1x1x32xf32> to vector<1x32xf32>
      %155 = vector.shape_cast %151 : vector<1x32xf32> to vector<1x1x32xf32>
      tpu.vector_store %arg5[%c2_33, %152, %c0_34], %155 {strides = array<i32>} : memref<6x16x32xf32, #tpu.memory_space<vmem>>, vector<1x1x32xf32>,
      %156 = arith.addi %1, %122 : i32
      %c6_i32_35 = arith.constant 6 : i32
      %157 = arith.muli %156, %c6_i32_35 : i32
      %c3_i32 = arith.constant 3 : i32
      %158 = arith.addi %157, %c3_i32 : i32
      %159 = arith.index_cast %158 : i32 to index
      %160 = memref.load %arg1[%159] : memref<192xi32, #tpu.memory_space<smem>>
      %161 = arith.index_cast %160 : i32 to index
      %c0_36 = arith.constant 0 : index
      %162 = vector.load %arg3[%161, %c0_36] : memref<32x32xf32, #tpu.memory_space<vmem>>, vector<1x32xf32>
      %c3_37 = arith.constant 3 : index
      %163 = arith.index_cast %122 : i32 to index
      %c0_38 = arith.constant 0 : index
      %164 = vector.load %arg5[%c3_37, %163, %c0_38] : memref<6x16x32xf32, #tpu.memory_space<vmem>>, vector<1x1x32xf32>
      %165 = vector.shape_cast %164 : vector<1x1x32xf32> to vector<1x32xf32>
      %166 = vector.shape_cast %162 : vector<1x32xf32> to vector<1x1x32xf32>
      tpu.vector_store %arg5[%c3_37, %163, %c0_38], %166 {strides = array<i32>} : memref<6x16x32xf32, #tpu.memory_space<vmem>>, vector<1x1x32xf32>,
      %167 = arith.addi %1, %122 : i32
      %c6_i32_39 = arith.constant 6 : i32
      %168 = arith.muli %167, %c6_i32_39 : i32
      %c4_i32 = arith.constant 4 : i32
      %169 = arith.addi %168, %c4_i32 : i32
      %170 = arith.index_cast %169 : i32 to index
      %171 = memref.load %arg1[%170] : memref<192xi32, #tpu.memory_space<smem>>
      %172 = arith.index_cast %171 : i32 to index
      %c0_40 = arith.constant 0 : index
      %173 = vector.load %arg3[%172, %c0_40] : memref<32x32xf32, #tpu.memory_space<vmem>>, vector<1x32xf32>
      %c4_41 = arith.constant 4 : index
      %174 = arith.index_cast %122 : i32 to index
      %c0_42 = arith.constant 0 : index
      %175 = vector.load %arg5[%c4_41, %174, %c0_42] : memref<6x16x32xf32, #tpu.memory_space<vmem>>, vector<1x1x32xf32>
      %176 = vector.shape_cast %175 : vector<1x1x32xf32> to vector<1x32xf32>
      %177 = vector.shape_cast %173 : vector<1x32xf32> to vector<1x1x32xf32>
      tpu.vector_store %arg5[%c4_41, %174, %c0_42], %177 {strides = array<i32>} : memref<6x16x32xf32, #tpu.memory_space<vmem>>, vector<1x1x32xf32>,
      %178 = arith.addi %1, %122 : i32
      %c6_i32_43 = arith.constant 6 : i32
      %179 = arith.muli %178, %c6_i32_43 : i32
      %c5_i32 = arith.constant 5 : i32
      %180 = arith.addi %179, %c5_i32 : i32
      %181 = arith.index_cast %180 : i32 to index
      %182 = memref.load %arg1[%181] : memref<192xi32, #tpu.memory_space<smem>>
      %183 = arith.index_cast %182 : i32 to index
      %c0_44 = arith.constant 0 : index
      %184 = vector.load %arg3[%183, %c0_44] : memref<32x32xf32, #tpu.memory_space<vmem>>, vector<1x32xf32>
      %c5_45 = arith.constant 5 : index
      %185 = arith.index_cast %122 : i32 to index
      %c0_46 = arith.constant 0 : index
      %186 = vector.load %arg5[%c5_45, %185, %c0_46] : memref<6x16x32xf32, #tpu.memory_space<vmem>>, vector<1x1x32xf32>
      %187 = vector.shape_cast %186 : vector<1x1x32xf32> to vector<1x32xf32>
      %188 = vector.shape_cast %184 : vector<1x32xf32> to vector<1x1x32xf32>
      tpu.vector_store %arg5[%c5_45, %185, %c0_46], %188 {strides = array<i32>} : memref<6x16x32xf32, #tpu.memory_space<vmem>>, vector<1x1x32xf32>,
    }
    %c16_i32_1 = arith.constant 16 : i32
    %3 = arith.index_cast %1 : i32 to index
    %c0 = arith.constant 0 : index
    %4 = vector.load %arg3[%3, %c0] : memref<32x32xf32, #tpu.memory_space<vmem>>, vector<16x32xf32>
    %c0_2 = arith.constant 0 : index
    %c0_3 = arith.constant 0 : index
    %5 = vector.load %arg2[%c0_2, %c0_3] : memref<16x24xf32, #tpu.memory_space<vmem>>, vector<16x24xf32>
    %c0_4 = arith.constant 0 : index
    %c0_5 = arith.constant 0 : index
    %c0_6 = arith.constant 0 : index
    %6 = vector.load %arg5[%c0_4, %c0_5, %c0_6] : memref<6x16x32xf32, #tpu.memory_space<vmem>>, vector<1x16x32xf32>
    %7 = vector.shape_cast %6 : vector<1x16x32xf32> to vector<16x32xf32>
    %c1 = arith.constant 1 : index
    %c0_7 = arith.constant 0 : index
    %c0_8 = arith.constant 0 : index
    %8 = vector.load %arg5[%c1, %c0_7, %c0_8] : memref<6x16x32xf32, #tpu.memory_space<vmem>>, vector<1x16x32xf32>
    %9 = vector.shape_cast %8 : vector<1x16x32xf32> to vector<16x32xf32>
    %c2 = arith.constant 2 : index
    %c0_9 = arith.constant 0 : index
    %c0_10 = arith.constant 0 : index
    %10 = vector.load %arg5[%c2, %c0_9, %c0_10] : memref<6x16x32xf32, #tpu.memory_space<vmem>>, vector<1x16x32xf32>
    %11 = vector.shape_cast %10 : vector<1x16x32xf32> to vector<16x32xf32>
    %c3 = arith.constant 3 : index
    %c0_11 = arith.constant 0 : index
    %c0_12 = arith.constant 0 : index
    %12 = vector.load %arg5[%c3, %c0_11, %c0_12] : memref<6x16x32xf32, #tpu.memory_space<vmem>>, vector<1x16x32xf32>
    %13 = vector.shape_cast %12 : vector<1x16x32xf32> to vector<16x32xf32>
    %c4 = arith.constant 4 : index
    %c0_13 = arith.constant 0 : index
    %c0_14 = arith.constant 0 : index
    %14 = vector.load %arg5[%c4, %c0_13, %c0_14] : memref<6x16x32xf32, #tpu.memory_space<vmem>>, vector<1x16x32xf32>
    %15 = vector.shape_cast %14 : vector<1x16x32xf32> to vector<16x32xf32>
    %c5 = arith.constant 5 : index
    %c0_15 = arith.constant 0 : index
    %c0_16 = arith.constant 0 : index
    %16 = vector.load %arg5[%c5, %c0_15, %c0_16] : memref<6x16x32xf32, #tpu.memory_space<vmem>>, vector<1x16x32xf32>
    %17 = vector.shape_cast %16 : vector<1x16x32xf32> to vector<16x32xf32>
    %18 = vector.extract_strided_slice %5 {offsets = [0, 0], sizes = [16, 1], strides = [1, 1]} : vector<16x24xf32> to vector<16x1xf32>
    %19 = vector.broadcast %18 : vector<16x1xf32> to vector<16x32xf32>
    %20 = arith.mulf %19, %7 : vector<16x32xf32>
    %21 = arith.addf %4, %20 : vector<16x32xf32>
    %22 = vector.extract_strided_slice %5 {offsets = [0, 1], sizes = [16, 1], strides = [1, 1]} : vector<16x24xf32> to vector<16x1xf32>
    %23 = vector.broadcast %22 : vector<16x1xf32> to vector<16x32xf32>
    %24 = arith.mulf %23, %9 : vector<16x32xf32>
    %25 = arith.addf %21, %24 : vector<16x32xf32>
    %26 = vector.extract_strided_slice %5 {offsets = [0, 2], sizes = [16, 1], strides = [1, 1]} : vector<16x24xf32> to vector<16x1xf32>
    %27 = vector.broadcast %26 : vector<16x1xf32> to vector<16x32xf32>
    %28 = arith.mulf %27, %11 : vector<16x32xf32>
    %29 = arith.addf %25, %28 : vector<16x32xf32>
    %30 = vector.extract_strided_slice %5 {offsets = [0, 3], sizes = [16, 1], strides = [1, 1]} : vector<16x24xf32> to vector<16x1xf32>
    %31 = vector.broadcast %30 : vector<16x1xf32> to vector<16x32xf32>
    %32 = arith.mulf %31, %13 : vector<16x32xf32>
    %33 = arith.addf %29, %32 : vector<16x32xf32>
    %34 = vector.extract_strided_slice %5 {offsets = [0, 4], sizes = [16, 1], strides = [1, 1]} : vector<16x24xf32> to vector<16x1xf32>
    %35 = vector.broadcast %34 : vector<16x1xf32> to vector<16x32xf32>
    %36 = arith.mulf %35, %15 : vector<16x32xf32>
    %37 = arith.addf %33, %36 : vector<16x32xf32>
    %38 = vector.extract_strided_slice %5 {offsets = [0, 5], sizes = [16, 1], strides = [1, 1]} : vector<16x24xf32> to vector<16x1xf32>
    %39 = vector.broadcast %38 : vector<16x1xf32> to vector<16x32xf32>
    %40 = arith.mulf %39, %17 : vector<16x32xf32>
    %41 = arith.addf %37, %40 : vector<16x32xf32>
    %42 = vector.extract_strided_slice %5 {offsets = [0, 6], sizes = [16, 1], strides = [1, 1]} : vector<16x24xf32> to vector<16x1xf32>
    %43 = vector.broadcast %42 : vector<16x1xf32> to vector<16x32xf32>
    %44 = arith.mulf %43, %7 : vector<16x32xf32>
    %45 = arith.addf %4, %44 : vector<16x32xf32>
    %46 = vector.extract_strided_slice %5 {offsets = [0, 7], sizes = [16, 1], strides = [1, 1]} : vector<16x24xf32> to vector<16x1xf32>
    %47 = vector.broadcast %46 : vector<16x1xf32> to vector<16x32xf32>
    %48 = arith.mulf %47, %9 : vector<16x32xf32>
    %49 = arith.addf %45, %48 : vector<16x32xf32>
    %50 = vector.extract_strided_slice %5 {offsets = [0, 8], sizes = [16, 1], strides = [1, 1]} : vector<16x24xf32> to vector<16x1xf32>
    %51 = vector.broadcast %50 : vector<16x1xf32> to vector<16x32xf32>
    %52 = arith.mulf %51, %11 : vector<16x32xf32>
    %53 = arith.addf %49, %52 : vector<16x32xf32>
    %54 = vector.extract_strided_slice %5 {offsets = [0, 9], sizes = [16, 1], strides = [1, 1]} : vector<16x24xf32> to vector<16x1xf32>
    %55 = vector.broadcast %54 : vector<16x1xf32> to vector<16x32xf32>
    %56 = arith.mulf %55, %13 : vector<16x32xf32>
    %57 = arith.addf %53, %56 : vector<16x32xf32>
    %58 = vector.extract_strided_slice %5 {offsets = [0, 10], sizes = [16, 1], strides = [1, 1]} : vector<16x24xf32> to vector<16x1xf32>
    %59 = vector.broadcast %58 : vector<16x1xf32> to vector<16x32xf32>
    %60 = arith.mulf %59, %15 : vector<16x32xf32>
    %61 = arith.addf %57, %60 : vector<16x32xf32>
    %62 = vector.extract_strided_slice %5 {offsets = [0, 11], sizes = [16, 1], strides = [1, 1]} : vector<16x24xf32> to vector<16x1xf32>
    %63 = vector.broadcast %62 : vector<16x1xf32> to vector<16x32xf32>
    %64 = arith.mulf %63, %17 : vector<16x32xf32>
    %65 = arith.addf %61, %64 : vector<16x32xf32>
    %66 = vector.extract_strided_slice %5 {offsets = [0, 12], sizes = [16, 1], strides = [1, 1]} : vector<16x24xf32> to vector<16x1xf32>
    %67 = vector.broadcast %66 : vector<16x1xf32> to vector<16x32xf32>
    %68 = arith.mulf %67, %7 : vector<16x32xf32>
    %69 = arith.addf %4, %68 : vector<16x32xf32>
    %70 = vector.extract_strided_slice %5 {offsets = [0, 13], sizes = [16, 1], strides = [1, 1]} : vector<16x24xf32> to vector<16x1xf32>
    %71 = vector.broadcast %70 : vector<16x1xf32> to vector<16x32xf32>
    %72 = arith.mulf %71, %9 : vector<16x32xf32>
    %73 = arith.addf %69, %72 : vector<16x32xf32>
    %74 = vector.extract_strided_slice %5 {offsets = [0, 14], sizes = [16, 1], strides = [1, 1]} : vector<16x24xf32> to vector<16x1xf32>
    %75 = vector.broadcast %74 : vector<16x1xf32> to vector<16x32xf32>
    %76 = arith.mulf %75, %11 : vector<16x32xf32>
    %77 = arith.addf %73, %76 : vector<16x32xf32>
    %78 = vector.extract_strided_slice %5 {offsets = [0, 15], sizes = [16, 1], strides = [1, 1]} : vector<16x24xf32> to vector<16x1xf32>
    %79 = vector.broadcast %78 : vector<16x1xf32> to vector<16x32xf32>
    %80 = arith.mulf %79, %13 : vector<16x32xf32>
    %81 = arith.addf %77, %80 : vector<16x32xf32>
    %82 = vector.extract_strided_slice %5 {offsets = [0, 16], sizes = [16, 1], strides = [1, 1]} : vector<16x24xf32> to vector<16x1xf32>
    %83 = vector.broadcast %82 : vector<16x1xf32> to vector<16x32xf32>
    %84 = arith.mulf %83, %15 : vector<16x32xf32>
    %85 = arith.addf %81, %84 : vector<16x32xf32>
    %86 = vector.extract_strided_slice %5 {offsets = [0, 17], sizes = [16, 1], strides = [1, 1]} : vector<16x24xf32> to vector<16x1xf32>
    %87 = vector.broadcast %86 : vector<16x1xf32> to vector<16x32xf32>
    %88 = arith.mulf %87, %17 : vector<16x32xf32>
    %89 = arith.addf %85, %88 : vector<16x32xf32>
    %90 = vector.extract_strided_slice %5 {offsets = [0, 18], sizes = [16, 1], strides = [1, 1]} : vector<16x24xf32> to vector<16x1xf32>
    %91 = vector.broadcast %90 : vector<16x1xf32> to vector<16x32xf32>
    %92 = arith.mulf %91, %7 : vector<16x32xf32>
    %93 = arith.addf %4, %92 : vector<16x32xf32>
    %94 = vector.extract_strided_slice %5 {offsets = [0, 19], sizes = [16, 1], strides = [1, 1]} : vector<16x24xf32> to vector<16x1xf32>
    %95 = vector.broadcast %94 : vector<16x1xf32> to vector<16x32xf32>
    %96 = arith.mulf %95, %9 : vector<16x32xf32>
    %97 = arith.addf %93, %96 : vector<16x32xf32>
    %98 = vector.extract_strided_slice %5 {offsets = [0, 20], sizes = [16, 1], strides = [1, 1]} : vector<16x24xf32> to vector<16x1xf32>
    %99 = vector.broadcast %98 : vector<16x1xf32> to vector<16x32xf32>
    %100 = arith.mulf %99, %11 : vector<16x32xf32>
    %101 = arith.addf %97, %100 : vector<16x32xf32>
    %102 = vector.extract_strided_slice %5 {offsets = [0, 21], sizes = [16, 1], strides = [1, 1]} : vector<16x24xf32> to vector<16x1xf32>
    %103 = vector.broadcast %102 : vector<16x1xf32> to vector<16x32xf32>
    %104 = arith.mulf %103, %13 : vector<16x32xf32>
    %105 = arith.addf %101, %104 : vector<16x32xf32>
    %106 = vector.extract_strided_slice %5 {offsets = [0, 22], sizes = [16, 1], strides = [1, 1]} : vector<16x24xf32> to vector<16x1xf32>
    %107 = vector.broadcast %106 : vector<16x1xf32> to vector<16x32xf32>
    %108 = arith.mulf %107, %15 : vector<16x32xf32>
    %109 = arith.addf %105, %108 : vector<16x32xf32>
    %110 = vector.extract_strided_slice %5 {offsets = [0, 23], sizes = [16, 1], strides = [1, 1]} : vector<16x24xf32> to vector<16x1xf32>
    %111 = vector.broadcast %110 : vector<16x1xf32> to vector<16x32xf32>
    %112 = arith.mulf %111, %17 : vector<16x32xf32>
    %113 = arith.addf %109, %112 : vector<16x32xf32>
    %114 = tpu.concatenate %41, %65, %89, %113 in 1 : vector<16x32xf32>, vector<16x32xf32>, vector<16x32xf32>, vector<16x32xf32> -> vector<16x128xf32>
    %cst = arith.constant 0.000000e+00 : f32
    %115 = vector.broadcast %cst : f32 to vector<16x128xf32>
    %116 = arith.cmpf oge, %114, %115 : vector<16x128xf32>
    %cst_17 = arith.constant 2.000000e-01 : f32
    %117 = vector.broadcast %cst_17 : f32 to vector<16x128xf32>
    %118 = arith.mulf %117, %114 : vector<16x128xf32>
    %119 = arith.select %116, %114, %118 : vector<16x128xi1>, vector<16x128xf32>
    %c0_18 = arith.constant 0 : index
    %c0_19 = arith.constant 0 : index
    %120 = vector.load %arg4[%c0_18, %c0_19] : memref<16x128xf32, #tpu.memory_space<vmem>>, vector<16x128xf32>
    tpu.vector_store %arg4[%c0_18, %c0_19], %119 {strides = array<i32>} : memref<16x128xf32, #tpu.memory_space<vmem>>, vector<16x128xf32>,
    return
  }
  func.func @transform_0(%arg0: i32, %arg1: memref<192xi32, #tpu.memory_space<smem>>) -> (i32, i32) {
    %c0_i32 = arith.constant 0 : i32
    %c0_i32_0 = arith.constant 0 : i32
    return %arg0, %c0_i32 : i32, i32
  }
  func.func @transform_1(%arg0: i32, %arg1: memref<192xi32, #tpu.memory_space<smem>>) -> (i32, i32) {
    %c0_i32 = arith.constant 0 : i32
    %c0_i32_0 = arith.constant 0 : i32
    %c0_i32_1 = arith.constant 0 : i32
    return %c0_i32, %c0_i32_0 : i32, i32
  }
  func.func @transform_2(%arg0: i32, %arg1: memref<192xi32, #tpu.memory_space<smem>>) -> (i32, i32) {
    %c0_i32 = arith.constant 0 : i32
    %c0_i32_0 = arith.constant 0 : i32
    return %arg0, %c0_i32 : i32, i32
  }
}

</mosaic_0001>

<llo_original>
// kernel: tpu_custom_call.1
$region0: #{tpu_custom_call.1}
  #allocation0 [shape = 'u32[]', space=smem, size = 0x4, offset = 0x4, fixed_abs, tag = 'smem constant byte address 0x4 - core index']
  #allocation1 [shape = 'u32[144,128]{1,0:T(1,128)}', space=vmem, size = 0x12000, scoped, tag = 'internal scratch']
  #allocation2 [shape = 'f32[6,16,32]{2,1,0:T(8,128)}', space=vmem, size = 0xc000, scoped, tag = 'scratch operand']
  #allocation3 [shape = 's32[1]{0}', space=sflag, size = 0x4, scoped, tag = 'scoped memory for tpu_custom_call.1']
  #allocation4 [shape = 'u8[1024]{0}', space=smem, size = 0x400, scoped, tag = 'prefetched SMEM operand 0']
  %s0 = inlined_call_operand.vmem [shape: s32[192], index: 0, kind: input, shape index: {}]
  %s1 = inlined_call_operand.vmem [shape: f32[32,24], index: 1, kind: input, shape index: {}]
  %s2 = inlined_call_operand.vmem [shape: f32[32,32], index: 2, kind: input, shape index: {}]
  %s3 = inlined_call_operand.hbm [shape: f32[32,128], index: 3, kind: output, shape index: {}]
  %s4 = sld [smem:[#allocation0]]
  $region48: #{tpu_custom_call.1} parent=0
    _
  %s6 = ssub.s32 1, %s4
  %s7 = scalar_select 0, %s6, %s4
  %s8 = sshll.u32 %s0, 4
  %s9 = int_to_ptr.vmem [resolvable:$true] %s8
  %11 = dma.vmem_to_smem %s9, 32, [#allocation4], [#allocation3]
  %12 = dma.done [#allocation3], 32
  %13 = sfence
  $region1: #{tpu_custom_call.1} parent=0
    #allocation5 [shape = 'u8[16384]{0}', space=vmem, size = 0x4000, scoped, tag = 'output window, operand 0']
    #allocation6 [shape = 's32[2]{0}', space=sflag, size = 0x8, scoped, tag = 'scoped memory for tpu_custom_call.1']
    %14 = vsyncpa [#allocation6], 0
    %s15 = scalar_lea.sflag [#allocation6], 1
    %16 = vsyncpa %s15, 0
    loop: start=0, step=1, limit=4
    $region2: #{tpu_custom_call.1} parent=1 // loop_pre_header
      _
    $region3: #{tpu_custom_call.1} parent=1 // loop_header
      %s18 = sphi 0, %s22
      %p19 = scmp.ge.s32.totalorder %s18, 4
      %s28 = sphi 0, %s30
      %s31 = sphi 0, %s28
      %s32 = sphi 0, %s31
      %s48 = sphi 0, %s32
      %s52 = sphi 0, %s52
      %s54 = sphi 0, %s52
      %s55 = sphi 0, %s54
      %s69 = sphi 0, %s55
      %s75 = sphi 0, %s77
      %s78 = sphi 0, %s75
      %s79 = sphi 0, %s78
      %s95 = sphi 0, %s79
    $region4: #{tpu_custom_call.1} parent=1 // loop_header_branch
      %21 = sbr.rel (%p19) target = $region8
    $region5: #{tpu_custom_call.1} parent=1 // loop_body
      %s23 = ssub.s32 %s18, 1
      %s24 = ssub.s32 %s18, 2
      %s25 = sadd.s32 %s18, 1
      %s26 = ssub.s32 %s18, %s25
      %p27 = scmp.eq.s32.totalorder %s26, 0
      %s29 = sadd.s32 %s28, 1
      %s30 = scalar_select %p27, %s28, %s29
      %p33 = pneg %p27
      %p34 = scmp.eq.s32.totalorder %s18, 1
      %p35 = por %p33, %p34
      %p36 = scmp.ne.s32.totalorder %s28, %s31
      %p37 = scmp.eq.s32.totalorder %s18, 0
      %p38 = por %p36, %p37
      %p39 = scmp.ne.s32.totalorder %s28, %s31
      %p40 = scmp.eq.s32.totalorder %s23, 1
      %p41 = por %p39, %p40
      %p42 = scmp.ne.s32.totalorder %s31, %s32
      %p43 = scmp.eq.s32.totalorder %s23, 0
      %p44 = por %p42, %p43
      %p45 = scmp.ne.s32.totalorder %s31, %s32
      %p46 = scmp.eq.s32.totalorder %s24, 1
      %p47 = por %p45, %p46
      %p49 = scmp.ne.s32.totalorder %s32, %s48
      %p50 = scmp.eq.s32.totalorder %s24, 0
      %p51 = por %p49, %p50
      %s53 = sadd.s32 %s52, 1
      %p56 = scmp.eq.s32.totalorder %s18, 1
      %p57 = scmp.ne.s32.totalorder %s52, %s54
      %p58 = scmp.eq.s32.totalorder %s18, 0
      %p59 = por %p57, %p58
      %p60 = scmp.ne.s32.totalorder %s52, %s54
      %p61 = scmp.eq.s32.totalorder %s23, 1
      %p62 = por %p60, %p61
      %p63 = scmp.ne.s32.totalorder %s54, %s55
      %p64 = scmp.eq.s32.totalorder %s23, 0
      %p65 = por %p63, %p64
      %p66 = scmp.ne.s32.totalorder %s54, %s55
      %p67 = scmp.eq.s32.totalorder %s24, 1
      %p68 = por %p66, %p67
      %p70 = scmp.ne.s32.totalorder %s55, %s69
      %p71 = scmp.eq.s32.totalorder %s24, 0
      %p72 = por %p70, %p71
      %s73 = ssub.s32 %s18, %s25
      %p74 = scmp.eq.s32.totalorder %s73, 0
      %s76 = sadd.s32 %s75, 1
      %s77 = scalar_select %p74, %s75, %s76
      %p80 = pneg %p74
      %p81 = scmp.eq.s32.totalorder %s18, 1
      %p82 = por %p80, %p81
      %p83 = scmp.ne.s32.totalorder %s75, %s78
      %p84 = scmp.eq.s32.totalorder %s18, 0
      %p85 = por %p83, %p84
      %p86 = scmp.ne.s32.totalorder %s75, %s78
      %p87 = scmp.eq.s32.totalorder %s23, 1
      %p88 = por %p86, %p87
      %p89 = scmp.ne.s32.totalorder %s78, %s79
      %p90 = scmp.eq.s32.totalorder %s23, 0
      %p91 = por %p89, %p90
      %p92 = scmp.ne.s32.totalorder %s78, %s79
      %p93 = scmp.eq.s32.totalorder %s24, 1
      %p94 = por %p92, %p93
      %p96 = scmp.ne.s32.totalorder %s79, %s95
      %p97 = scmp.eq.s32.totalorder %s24, 0
      %p98 = por %p96, %p97
      %p99 = scmp.le.s32.totalorder 1, %s18
      %p100 = scmp.lt.s32.totalorder %s18, 3
      %p101 = pnand %p99, %p100
      %p102 = pneg %p101
      // Predicated region
      $region9: #{tpu_custom_call.1} parent=5 // pred_check
        _
      $region10: #{tpu_custom_call.1} parent=5 // pred_check_branch
        %104 = sbr.rel (%p101) target = $region12
      $region11: #{tpu_custom_call.1} parent=5 // pred_region
        %s105 = ssub.s32 %s18, 1
        // Predicated region
        $region13: #{tpu_custom_call.1} parent=11 // pred_check
          %p106 = pneg %p65
        $region14: #{tpu_custom_call.1} parent=11 // pred_check_branch
          %108 = sbr.rel (%p106) target = $region16
        $region15: #{tpu_custom_call.1} parent=11 // pred_region
          _
        $region16: #{tpu_custom_call.1} parent=11 // pred_fallthru
          _
      $region12: #{tpu_custom_call.1} parent=5 // pred_fallthru
        _
      %p109 = scmp.lt.s32.totalorder %s18, 2
      // Predicated region
      $region17: #{tpu_custom_call.1} parent=5 // pred_check
        %p110 = pneg %p109
      $region18: #{tpu_custom_call.1} parent=5 // pred_check_branch
        %112 = sbr.rel (%p110) target = $region20
      $region19: #{tpu_custom_call.1} parent=5 // pred_region
        // Predicated region
        $region21: #{tpu_custom_call.1} parent=19 // pred_check
          %p113 = pneg %p38
        $region22: #{tpu_custom_call.1} parent=19 // pred_check_branch
          %115 = sbr.rel (%p113) target = $region24
        $region23: #{tpu_custom_call.1} parent=19 // pred_region
          %s116 = smul.u32 2, %s18
          %p117 = scmp.lt.s32.totalorder %s116, 3
          %s118 = scalar_select %p117, %s116, 3
          %s119 = smul.addr %s118, 8
          %s120 = scalar_lea.vmem %s1, %s119
          %s121 = smul.u32 2, %s18
        $region24: #{tpu_custom_call.1} parent=19 // pred_fallthru
          _
      $region20: #{tpu_custom_call.1} parent=5 // pred_fallthru
        _
      %p122 = scmp.le.s32.totalorder 1, %s18
      %p123 = scmp.lt.s32.totalorder %s18, 3
      %p124 = pnand %p122, %p123
      %p125 = pneg %p124
      // Predicated region
      $region25: #{tpu_custom_call.1} parent=5 // pred_check
        _
      $region26: #{tpu_custom_call.1} parent=5 // pred_check_branch
        %127 = sbr.rel (%p124) target = $region28
      $region27: #{tpu_custom_call.1} parent=5 // pred_region
        %s128 = ssub.s32 %s18, 1
        %s129 = smul.u32 2, %s23
        %p130 = scmp.lt.s32.totalorder %s129, 3
        %s131 = scalar_select %p130, %s129, 3
        %s132 = smul.addr %s131, 8
        %s133 = scalar_lea.vmem %s1, %s132
        %p134 = pneg %p44
        %p135 = pneg %p41
        %p136 = pneg %p65
        %p137 = pneg %p62
        %p138 = pneg %p91
        %p139 = pneg %p88
        %s140 = sand.u32 %s78, 1
        %s141 = scalar_lea.sflag [#allocation6], %s140
        %s142 = sand.u32 %s78, 1
        %s143 = smul.addr %s142, 16
        %s144 = scalar_lea.vmem [#allocation5], %s143
        %s145 = smul.u32 2, %s23
        %p146 = scmp.lt.s32.totalorder %s145, 3
        %s147 = scalar_select %p146, %s145, 3
        %s148 = smul.addr %s147, 8
        %s149 = scalar_lea.vmem %s1, %s148
        %s150 = smul.u32 2, %s23
        %s151 = smul.u32 2, %s23
        %s152 = smul.u32 %s23, 16
        loop: start=0, step=1, limit=16
        $region29: #{tpu_custom_call.1} parent=27 // loop_pre_header
          _
        $region30: #{tpu_custom_call.1} parent=27 // loop_header
          %s154 = sphi 0, %s158
          %p155 = scmp.ge.s32.totalorder %s154, 16
        $region31: #{tpu_custom_call.1} parent=27 // loop_header_branch
          %157 = sbr.rel (%p155) target = $region35
        $region32: #{tpu_custom_call.1} parent=27 // loop_body
          %s159 = sadd.s32 %s152, %s154
          %s160 = smul.u32 %s159, 6
          %s161 = sld [smem:[#allocation4 + %s160]]
          %s162 = scalar_lea.vmem %s2, %s161
          %v163 = vld [vmem:[%s162] sm:$0x1]
          %s164 = scalar_lea.vmem [#allocation2], %s154
          %vm165 = vcmask 253952
          %166 = vst.msk [vmem:[%s164] sm:$0x1] %vm165, %v163
          %s167 = sadd.s32 %s160, 1
          %s168 = sld [smem:[#allocation4 + %s167]]
          %s169 = scalar_lea.vmem %s2, %s168
          %v170 = vld [vmem:[%s169] sm:$0x1]
          %s171 = sadd.s32 %s154, 16
          %s172 = scalar_lea.vmem [#allocation2], %s171
          %173 = vst.msk [vmem:[%s172] sm:$0x1] %vm165, %v170
          %s174 = sadd.s32 %s160, 2
          %s175 = sld [smem:[#allocation4 + %s174]]
          %s176 = scalar_lea.vmem %s2, %s175
          %v177 = vld [vmem:[%s176] sm:$0x1]
          %s178 = sadd.s32 %s154, 32
          %s179 = scalar_lea.vmem [#allocation2], %s178
          %180 = vst.msk [vmem:[%s179] sm:$0x1] %vm165, %v177
          %s181 = sadd.s32 %s160, 3
          %s182 = sld [smem:[#allocation4 + %s181]]
          %s183 = scalar_lea.vmem %s2, %s182
          %v184 = vld [vmem:[%s183] sm:$0x1]
          %s185 = sadd.s32 %s154, 48
          %s186 = scalar_lea.vmem [#allocation2], %s185
          %187 = vst.msk [vmem:[%s186] sm:$0x1] %vm165, %v184
          %s188 = sadd.s32 %s160, 4
          %s189 = sld [smem:[#allocation4 + %s188]]
          %s190 = scalar_lea.vmem %s2, %s189
          %v191 = vld [vmem:[%s190] sm:$0x1]
          %s192 = sadd.s32 %s154, 64
          %s193 = scalar_lea.vmem [#allocation2], %s192
          %194 = vst.msk [vmem:[%s193] sm:$0x1] %vm165, %v191
          %s195 = sadd.s32 %s160, 5
          %s196 = sld [smem:[#allocation4 + %s195]]
          %s197 = scalar_lea.vmem %s2, %s196
          %v198 = vld [vmem:[%s197] sm:$0x1]
          %s199 = sadd.s32 %s154, 80
          %s200 = scalar_lea.vmem [#allocation2], %s199
          %201 = vst.msk [vmem:[%s200] sm:$0x1] %vm165, %v198
        $region33: #{tpu_custom_call.1} parent=27 // loop_footer
          %s158 = sadd.s32 1, %s154
        $region34: #{tpu_custom_call.1} parent=27 // loop_footer_branch
          %153 = sbr.rel target = $region30
        $region35: #{tpu_custom_call.1} parent=27 // loop_exit
          _
        %s202 = scalar_lea.vmem %s2, %s152
        %v203 = vld [vmem:[%s202] sm:$0xff]
        %v204 = vld [vmem:[%s202 + $0x8] sm:$0xff]
        %v205 = vld [vmem:[%s149] sm:$0xff]
        %v206 = vld [vmem:[%s149 + $0x8] sm:$0xff]
        %v207 = vld [vmem:[#allocation2] sm:$0xff]
        %v208 = vld [vmem:[#allocation2 + $0x8] sm:$0xff]
        %s209 = scalar_lea.vmem [#allocation2], 16
        %v210 = vld [vmem:[%s209] sm:$0xff]
        %v211 = vld [vmem:[%s209 + $0x8] sm:$0xff]
        %s212 = scalar_lea.vmem [#allocation2], 32
        %v213 = vld [vmem:[%s212] sm:$0xff]
        %v214 = vld [vmem:[%s212 + $0x8] sm:$0xff]
        %s215 = scalar_lea.vmem [#allocation2], 48
        %v216 = vld [vmem:[%s215] sm:$0xff]
        %v217 = vld [vmem:[%s215 + $0x8] sm:$0xff]
        %s218 = scalar_lea.vmem [#allocation2], 64
        %v219 = vld [vmem:[%s218] sm:$0xff]
        %v220 = vld [vmem:[%s218 + $0x8] sm:$0xff]
        %s221 = scalar_lea.vmem [#allocation2], 80
        %v222 = vld [vmem:[%s221] sm:$0xff]
        %v223 = vld [vmem:[%s221 + $0x8] sm:$0xff]
        %225 = vset.pattern.permute.xlu0 0
        %226 = vperm.xlu0 %225, %v205
        %v227 = vpop.permute.xlu0 %226
        %230 = vset.pattern.permute.xlu0 0
        %231 = vperm.xlu0 %230, %v206
        %v232 = vpop.permute.xlu0 %231
        %v234 = vmul.f32 %v227, %v207
        %v235 = vmul.f32 %v232, %v208
        %v236 = vadd.f32 %v203, %v234
        %v237 = vadd.f32 %v204, %v235
        %238 = vset.pattern.permute.xlu0 1
        %239 = vperm.xlu0 %238, %v205
        %v240 = vpop.permute.xlu0 %239
        %242 = vset.pattern.permute.xlu0 1
        %243 = vperm.xlu0 %242, %v206
        %v244 = vpop.permute.xlu0 %243
        %v246 = vmul.f32 %v240, %v210
        %v247 = vmul.f32 %v244, %v211
        %v248 = vadd.f32 %v236, %v246
        %v249 = vadd.f32 %v237, %v247
        %250 = vset.pattern.permute.xlu0 2
        %251 = vperm.xlu0 %250, %v205
        %v252 = vpop.permute.xlu0 %251
        %254 = vset.pattern.permute.xlu0 2
        %255 = vperm.xlu0 %254, %v206
        %v256 = vpop.permute.xlu0 %255
        %v258 = vmul.f32 %v252, %v213
        %v259 = vmul.f32 %v256, %v214
        %v260 = vadd.f32 %v248, %v258
        %v261 = vadd.f32 %v249, %v259
        %262 = vset.pattern.permute.xlu0 3
        %263 = vperm.xlu0 %262, %v205
        %v264 = vpop.permute.xlu0 %263
        %266 = vset.pattern.permute.xlu0 3
        %267 = vperm.xlu0 %266, %v206
        %v268 = vpop.permute.xlu0 %267
        %v270 = vmul.f32 %v264, %v216
        %v271 = vmul.f32 %v268, %v217
        %v272 = vadd.f32 %v260, %v270
        %v273 = vadd.f32 %v261, %v271
        %274 = vset.pattern.permute.xlu0 4
        %275 = vperm.xlu0 %274, %v205
        %v276 = vpop.permute.xlu0 %275
        %278 = vset.pattern.permute.xlu0 4
        %279 = vperm.xlu0 %278, %v206
        %v280 = vpop.permute.xlu0 %279
        %v282 = vmul.f32 %v276, %v219
        %v283 = vmul.f32 %v280, %v220
        %v284 = vadd.f32 %v272, %v282
        %v285 = vadd.f32 %v273, %v283
        %286 = vset.pattern.permute.xlu0 5
        %287 = vperm.xlu0 %286, %v205
        %v288 = vpop.permute.xlu0 %287
        %290 = vset.pattern.permute.xlu0 5
        %291 = vperm.xlu0 %290, %v206
        %v292 = vpop.permute.xlu0 %291
        %v294 = vmul.f32 %v288, %v222
        %v295 = vmul.f32 %v292, %v223
        %v296 = vadd.f32 %v284, %v294
        %v297 = vadd.f32 %v285, %v295
        %298 = vset.pattern.permute.xlu0 6
        %299 = vperm.xlu0 %298, %v205
        %v300 = vpop.permute.xlu0 %299
        %302 = vset.pattern.permute.xlu0 6
        %303 = vperm.xlu0 %302, %v206
        %v304 = vpop.permute.xlu0 %303
        %v306 = vmul.f32 %v300, %v207
        %v307 = vmul.f32 %v304, %v208
        %v308 = vadd.f32 %v203, %v306
        %v309 = vadd.f32 %v204, %v307
        %310 = vset.pattern.permute.xlu0 7
        %311 = vperm.xlu0 %310, %v205
        %v312 = vpop.permute.xlu0 %311
        %314 = vset.pattern.permute.xlu0 7
        %315 = vperm.xlu0 %314, %v206
        %v316 = vpop.permute.xlu0 %315
        %v318 = vmul.f32 %v312, %v210
        %v319 = vmul.f32 %v316, %v211
        %v320 = vadd.f32 %v308, %v318
        %v321 = vadd.f32 %v309, %v319
        %322 = vset.pattern.permute.xlu0 8
        %323 = vperm.xlu0 %322, %v205
        %v324 = vpop.permute.xlu0 %323
        %326 = vset.pattern.permute.xlu0 8
        %327 = vperm.xlu0 %326, %v206
        %v328 = vpop.permute.xlu0 %327
        %v330 = vmul.f32 %v324, %v213
        %v331 = vmul.f32 %v328, %v214
        %v332 = vadd.f32 %v320, %v330
        %v333 = vadd.f32 %v321, %v331
        %334 = vset.pattern.permute.xlu0 9
        %335 = vperm.xlu0 %334, %v205
        %v336 = vpop.permute.xlu0 %335
        %338 = vset.pattern.permute.xlu0 9
        %339 = vperm.xlu0 %338, %v206
        %v340 = vpop.permute.xlu0 %339
        %v342 = vmul.f32 %v336, %v216
        %v343 = vmul.f32 %v340, %v217
        %v344 = vadd.f32 %v332, %v342
        %v345 = vadd.f32 %v333, %v343
        %346 = vset.pattern.permute.xlu0 10
        %347 = vperm.xlu0 %346, %v205
        %v348 = vpop.permute.xlu0 %347
        %350 = vset.pattern.permute.xlu0 10
        %351 = vperm.xlu0 %350, %v206
        %v352 = vpop.permute.xlu0 %351
        %v354 = vmul.f32 %v348, %v219
        %v355 = vmul.f32 %v352, %v220
        %v356 = vadd.f32 %v344, %v354
        %v357 = vadd.f32 %v345, %v355
        %358 = vset.pattern.permute.xlu0 11
        %359 = vperm.xlu0 %358, %v205
        %v360 = vpop.permute.xlu0 %359
        %362 = vset.pattern.permute.xlu0 11
        %363 = vperm.xlu0 %362, %v206
        %v364 = vpop.permute.xlu0 %363
        %v366 = vmul.f32 %v360, %v222
        %v367 = vmul.f32 %v364, %v223
        %v368 = vadd.f32 %v356, %v366
        %v369 = vadd.f32 %v357, %v367
        %370 = vset.pattern.permute.xlu0 12
        %371 = vperm.xlu0 %370, %v205
        %v372 = vpop.permute.xlu0 %371
        %374 = vset.pattern.permute.xlu0 12
        %375 = vperm.xlu0 %374, %v206
        %v376 = vpop.permute.xlu0 %375
        %v378 = vmul.f32 %v372, %v207
        %v379 = vmul.f32 %v376, %v208
        %v380 = vadd.f32 %v203, %v378
        %v381 = vadd.f32 %v204, %v379
        %382 = vset.pattern.permute.xlu0 13
        %383 = vperm.xlu0 %382, %v205
        %v384 = vpop.permute.xlu0 %383
        %386 = vset.pattern.permute.xlu0 13
        %387 = vperm.xlu0 %386, %v206
        %v388 = vpop.permute.xlu0 %387
        %v390 = vmul.f32 %v384, %v210
        %v391 = vmul.f32 %v388, %v211
        %v392 = vadd.f32 %v380, %v390
        %v393 = vadd.f32 %v381, %v391
        %394 = vset.pattern.permute.xlu0 14
        %395 = vperm.xlu0 %394, %v205
        %v396 = vpop.permute.xlu0 %395
        %398 = vset.pattern.permute.xlu0 14
        %399 = vperm.xlu0 %398, %v206
        %v400 = vpop.permute.xlu0 %399
        %v402 = vmul.f32 %v396, %v213
        %v403 = vmul.f32 %v400, %v214
        %v404 = vadd.f32 %v392, %v402
        %v405 = vadd.f32 %v393, %v403
        %406 = vset.pattern.permute.xlu0 15
        %407 = vperm.xlu0 %406, %v205
        %v408 = vpop.permute.xlu0 %407
        %410 = vset.pattern.permute.xlu0 15
        %411 = vperm.xlu0 %410, %v206
        %v412 = vpop.permute.xlu0 %411
        %v414 = vmul.f32 %v408, %v216
        %v415 = vmul.f32 %v412, %v217
        %v416 = vadd.f32 %v404, %v414
        %v417 = vadd.f32 %v405, %v415
        %418 = vset.pattern.permute.xlu0 16
        %419 = vperm.xlu0 %418, %v205
        %v420 = vpop.permute.xlu0 %419
        %422 = vset.pattern.permute.xlu0 16
        %423 = vperm.xlu0 %422, %v206
        %v424 = vpop.permute.xlu0 %423
        %v426 = vmul.f32 %v420, %v219
        %v427 = vmul.f32 %v424, %v220
        %v428 = vadd.f32 %v416, %v426
        %v429 = vadd.f32 %v417, %v427
        %430 = vset.pattern.permute.xlu0 17
        %431 = vperm.xlu0 %430, %v205
        %v432 = vpop.permute.xlu0 %431
        %434 = vset.pattern.permute.xlu0 17
        %435 = vperm.xlu0 %434, %v206
        %v436 = vpop.permute.xlu0 %435
        %v438 = vmul.f32 %v432, %v222
        %v439 = vmul.f32 %v436, %v223
        %v440 = vadd.f32 %v428, %v438
        %v441 = vadd.f32 %v429, %v439
        %442 = vset.pattern.permute.xlu0 18
        %443 = vperm.xlu0 %442, %v205
        %v444 = vpop.permute.xlu0 %443
        %446 = vset.pattern.permute.xlu0 18
        %447 = vperm.xlu0 %446, %v206
        %v448 = vpop.permute.xlu0 %447
        %v450 = vmul.f32 %v444, %v207
        %v451 = vmul.f32 %v448, %v208
        %v452 = vadd.f32 %v203, %v450
        %v453 = vadd.f32 %v204, %v451
        %454 = vset.pattern.permute.xlu0 19
        %455 = vperm.xlu0 %454, %v205
        %v456 = vpop.permute.xlu0 %455
        %458 = vset.pattern.permute.xlu0 19
        %459 = vperm.xlu0 %458, %v206
        %v460 = vpop.permute.xlu0 %459
        %v462 = vmul.f32 %v456, %v210
        %v463 = vmul.f32 %v460, %v211
        %v464 = vadd.f32 %v452, %v462
        %v465 = vadd.f32 %v453, %v463
        %466 = vset.pattern.permute.xlu0 20
        %467 = vperm.xlu0 %466, %v205
        %v468 = vpop.permute.xlu0 %467
        %470 = vset.pattern.permute.xlu0 20
        %471 = vperm.xlu0 %470, %v206
        %v472 = vpop.permute.xlu0 %471
        %v474 = vmul.f32 %v468, %v213
        %v475 = vmul.f32 %v472, %v214
        %v476 = vadd.f32 %v464, %v474
        %v477 = vadd.f32 %v465, %v475
        %478 = vset.pattern.permute.xlu0 21
        %479 = vperm.xlu0 %478, %v205
        %v480 = vpop.permute.xlu0 %479
        %482 = vset.pattern.permute.xlu0 21
        %483 = vperm.xlu0 %482, %v206
        %v484 = vpop.permute.xlu0 %483
        %v486 = vmul.f32 %v480, %v216
        %v487 = vmul.f32 %v484, %v217
        %v488 = vadd.f32 %v476, %v486
        %v489 = vadd.f32 %v477, %v487
        %490 = vset.pattern.permute.xlu0 22
        %491 = vperm.xlu0 %490, %v205
        %v492 = vpop.permute.xlu0 %491
        %494 = vset.pattern.permute.xlu0 22
        %495 = vperm.xlu0 %494, %v206
        %v496 = vpop.permute.xlu0 %495
        %v498 = vmul.f32 %v492, %v219
        %v499 = vmul.f32 %v496, %v220
        %v500 = vadd.f32 %v488, %v498
        %v501 = vadd.f32 %v489, %v499
        %502 = vset.pattern.permute.xlu0 23
        %503 = vperm.xlu0 %502, %v205
        %v504 = vpop.permute.xlu0 %503
        %506 = vset.pattern.permute.xlu0 23
        %507 = vperm.xlu0 %506, %v206
        %v508 = vpop.permute.xlu0 %507
        %v510 = vmul.f32 %v504, %v222
        %v511 = vmul.f32 %v508, %v223
        %v512 = vadd.f32 %v500, %v510
        %v513 = vadd.f32 %v501, %v511
        %516 = vrot.lane.b32.xlu0 %v368, 32
        %v517 = vpop.permute.xlu0 %516
        %518 = vrot.lane.b32.xlu0 %v369, 32
        %v519 = vpop.permute.xlu0 %518
        %524 = vrot.lane.b32.xlu0 %v440, 64
        %v525 = vpop.permute.xlu0 %524
        %526 = vrot.lane.b32.xlu0 %v441, 64
        %v527 = vpop.permute.xlu0 %526
        %532 = vrot.lane.b32.xlu0 %v512, 96
        %v533 = vpop.permute.xlu0 %532
        %534 = vrot.lane.b32.xlu0 %v513, 96
        %v535 = vpop.permute.xlu0 %534
        %vm538 = vcmask 261120
        %v539 = vsel %vm538, %v296, %v517
        %v540 = vsel %vm538, %v297, %v519
        %vm541 = vcmask 523264
        %v542 = vsel %vm541, %v539, %v525
        %v543 = vsel %vm541, %v540, %v527
        %vm544 = vcmask 785408
        %v545 = vsel %vm544, %v542, %v533
        %v546 = vsel %vm544, %v543, %v535
        %vm547 = vcmp.ge.f32.partialorder %v545, 0.0
        %vm548 = vcmp.ge.f32.partialorder %v546, 0.0
        %v549 = vmul.f32 %v545, 0.2
        %v550 = vmul.f32 %v546, 0.2
        %v551 = vsel %vm547, %v545, %v549
        %v552 = vsel %vm548, %v546, %v550
        %553 = vst [vmem:[%s144] sm:$0xff] %v551
        %554 = vst [vmem:[%s144 + $0x8] sm:$0xff] %v552
        %s555 = sand.u32 %s78, 1
        %s556 = scalar_lea.sflag [#allocation6], %s555
        %s557 = sand.u32 %s78, 1
        %s558 = smul.addr %s557, 16
        %s559 = scalar_lea.vmem [#allocation5], %s558
        // Predicated region
        $region36: #{tpu_custom_call.1} parent=27 // pred_check
          %p560 = pneg %p88
        $region37: #{tpu_custom_call.1} parent=27 // pred_check_branch
          %562 = sbr.rel (%p560) target = $region39
        $region38: #{tpu_custom_call.1} parent=27 // pred_region
          %s563 = smul.u32 2, %s23
          %s565 = ssub.s32 256, 256
          %566 = vsyncadd %s556, %s565
          %s567 = smul.addr %s563, 128
          %s568 = scalar_lea.hbm %s3, %s567
          %s569 = sshll.u32 %s559, 4
          %s570 = int_to_ptr.vmem [resolvable:$true] %s569
          %575 = dma.vmem_to_hbm [thread:$0]  %s570, 256, %s568, %s556, 128, 128, 8
        $region39: #{tpu_custom_call.1} parent=27 // pred_fallthru
          _
      $region28: #{tpu_custom_call.1} parent=5 // pred_fallthru
        _
      %p576 = scmp.le.s32.totalorder 2, %s18
      // Predicated region
      $region40: #{tpu_custom_call.1} parent=5 // pred_check
        %p577 = pneg %p576
      $region41: #{tpu_custom_call.1} parent=5 // pred_check_branch
        %579 = sbr.rel (%p577) target = $region43
      $region42: #{tpu_custom_call.1} parent=5 // pred_region
        %s580 = ssub.s32 %s18, 2
        // Predicated region
        $region44: #{tpu_custom_call.1} parent=42 // pred_check
          %p581 = pneg %p94
        $region45: #{tpu_custom_call.1} parent=42 // pred_check_branch
          %583 = sbr.rel (%p581) target = $region47
        $region46: #{tpu_custom_call.1} parent=42 // pred_region
          %s584 = sand.u32 %s79, 1
          %s585 = scalar_lea.sflag [#allocation6], %s584
          %s586 = sand.u32 %s79, 1
          %s587 = smul.addr %s586, 16
          %s588 = scalar_lea.vmem [#allocation5], %s587
          %589 = dma.done %s585, 256
        $region47: #{tpu_custom_call.1} parent=42 // pred_fallthru
          _
      $region43: #{tpu_custom_call.1} parent=5 // pred_fallthru
        _
    $region6: #{tpu_custom_call.1} parent=1 // loop_footer
      %s22 = sadd.s32 1, %s18
    $region7: #{tpu_custom_call.1} parent=1 // loop_footer_branch
      %17 = sbr.rel target = $region3
    $region8: #{tpu_custom_call.1} parent=1 // loop_exit
      _
    %590 = vsyncpa [#allocation6], 1
    %s591 = scalar_lea.sflag [#allocation6], 1
    %592 = vsyncpa %s591, 1

</llo_original>
